<compile_context>
chip_gen: v7x
topology: tpu7x:2x2x1
jax: 0.10.0
libtpu: 0.0.40
codegen_flags: <defaults>
</compile_context>

<pallas_src>
import math

import jax
import jax.numpy as jnp
from jax.experimental import pallas as pl
from jax.experimental.pallas import tpu as pltpu


def _round_up(x, mult):
    return (x + mult - 1) // mult * mult


def _cdiv(a, b):
    return (a + b - 1) // b


def _default_config():
    """Generation-aware tile / scoped-VMEM defaults (f32 operands)."""
    try:
        kind = jax.devices()[0].device_kind.lower()
    except Exception:  # defensive; fall through to conservative defaults
        kind = ""
    if "v5" in kind or "v6" in kind:
        # 128 MiB physical VMEM: large resident panels + raised scoped limit
        # keep the MXU fed from ~0.8-1.4 TB/s HBM.
        return dict(tm=512, tn=1024, tk=1024, vmem_limit=96 * 1024 * 1024)
    # v7x (64 MiB per-TC VMEM) and unknown chips: ~10-12 MiB of double-buffered
    # tiles, comfortably inside a 48 MiB scoped limit with Mosaic headroom.
    return dict(tm=512, tn=512, tk=1024, vmem_limit=48 * 1024 * 1024)


# ----------------------------- kernels --------------------------------------

def _linear_kernel_accum_in_out(x_ref, w_ref, b_ref, o_ref):
    """f32 output: accumulate directly into the resident output block.

    The output BlockSpec ignores the K grid axis, so o_ref stays resident in
    VMEM across the whole K reduction and is written back to HBM exactly once
    per (i, j) tile. The bias seeds the accumulator at k == 0.
    """

    @pl.when(pl.program_id(2) == 0)
    def _():
        o_ref[...] = jnp.broadcast_to(b_ref[...], o_ref.shape).astype(o_ref.dtype)

    o_ref[...] += jnp.dot(
        x_ref[...], w_ref[...], preferred_element_type=jnp.float32
    )


def _linear_kernel_f32_scratch(x_ref, w_ref, b_ref, o_ref, acc_ref):
    """Low-precision output: f32 VMEM accumulator, cast on the final K step."""
    k_step = pl.program_id(2)

    @pl.when(k_step == 0)
    def _():
        acc_ref[...] = jnp.zeros_like(acc_ref)

    acc_ref[...] += jnp.dot(
        x_ref[...], w_ref[...], preferred_element_type=jnp.float32
    )

    @pl.when(k_step == pl.num_programs(2) - 1)
    def _():
        o_ref[...] = (acc_ref[...] + b_ref[...]).astype(o_ref.dtype)


# ----------------------------- wrapper --------------------------------------

def linear_forward(x, weights, bias, *, tm=None, tn=None, tk=None):
    """y = x @ weights + bias  (matches Linear.forward)."""
    n, k = x.shape
    k2, m = weights.shape
    assert k == k2 and bias.shape == (1, m)
    out_dtype = jnp.promote_types(x.dtype, weights.dtype)

    cfg = _default_config()
    tm = cfg["tm"] if tm is None else tm
    tn = cfg["tn"] if tn is None else tn
    tk = cfg["tk"] if tk is None else tk

    # Shrink tiles for small problems. tn/tk stay 256-aligned so a tile never
    # half-fills the 256-wide MXU on v6e/v7x (harmless on v5e's 128-wide MXU);
    # tm aligns to the sublane packing of the input dtype.
    sublane = 16 if x.dtype == jnp.bfloat16 else 8
    tm = min(tm, _round_up(n, sublane))
    tn = min(tn, _round_up(m, 256))
    tk = min(tk, _round_up(k, 256))

    # Small-batch (decode-like) calls collapse the row axis to a single block;
    # make sure the column axis has >=2 blocks so both v7x TensorCores get
    # work. No effect on single-TC v5e/v6e.
    if _cdiv(n, tm) == 1 and tn >= 512 and _round_up(m, tn) == tn:
        tn //= 2

    # Zero-pad ragged edges only when required (padded K columns are zero, so
    # they contribute nothing). For real models, pre-pad weights/bias once at
    # init rather than paying this HBM copy on every call.
    n_pad, k_pad, m_pad = _round_up(n, tm), _round_up(k, tk), _round_up(m, tn)
    if (n_pad, k_pad) != (n, k):
        x = jnp.pad(x, ((0, n_pad - n), (0, k_pad - k)))
    if (k_pad, m_pad) != (k, m):
        weights = jnp.pad(weights, ((0, k_pad - k), (0, m_pad - m)))
    if m_pad != m:
        bias = jnp.pad(bias, ((0, 0), (0, m_pad - m)))

    grid = (n_pad // tm, m_pad // tn, k_pad // tk)

    in_specs = [
        pl.BlockSpec((tm, tk), lambda i, j, kk: (i, kk)),
        pl.BlockSpec((tk, tn), lambda i, j, kk: (kk, j)),
        pl.BlockSpec((1, tn), lambda i, j, kk: (0, j)),
    ]
    out_spec = pl.BlockSpec((tm, tn), lambda i, j, kk: (i, j))

    if out_dtype == jnp.float32:
        kernel, scratch = _linear_kernel_accum_in_out, []
    else:
        kernel, scratch = _linear_kernel_f32_scratch, [
            pltpu.VMEM((tm, tn), jnp.float32)
        ]

    out = pl.pallas_call(
        kernel,
        out_shape=jax.ShapeDtypeStruct((n_pad, m_pad), out_dtype),
        grid_spec=pltpu.PrefetchScalarGridSpec(
            num_scalar_prefetch=0,
            grid=grid,
            in_specs=in_specs,
            out_specs=out_spec,
            scratch_shapes=scratch,
        ),
        compiler_params=pltpu.CompilerParams(
            # Row/column tiles shard across TensorCores (v7x megacore); K is
            # the sequential reduction axis for the resident accumulator.
            dimension_semantics=("parallel", "parallel", "arbitrary"),
            vmem_limit_bytes=cfg["vmem_limit"],
        ),
    )(x, weights, bias)

    if (n_pad, m_pad) != (n, m):
        out = out[:n, :m]
    return out


def init_linear_params(key, size_in, size_out, dtype=jnp.float32):
    """Deterministic re-implementation of Linear.init_param (uniform mix)."""
    std = math.sqrt(2.0 / (size_in + size_out))
    a = math.sqrt(3.0) * std
    k1, k2, k3, k4 = jax.random.split(key, 4)
    weights = (2.0 * a * jax.random.uniform(k1, (size_in, size_out), jnp.float32)
               - a * jax.random.uniform(k2, (size_in, size_out), jnp.float32))
    bias = (2.0 * a * jax.random.uniform(k3, (1, size_out), jnp.float32)
            - a * jax.random.uniform(k4, (1, size_out), jnp.float32))
    return weights.astype(dtype), bias.astype(dtype)


if __name__ == "__main__":
    key = jax.random.PRNGKey(0)

    # 1) Small demo shapes consistent with the module (batch=8, hidden=32).
    k_x, k_p = jax.random.split(key)
    batch, size_in, size_out = 8, 32, 32
    x = jax.random.normal(k_x, (batch, size_in), jnp.float32)
    weights, bias = init_linear_params(k_p, size_in, size_out)

    y = linear_forward(x, weights, bias)
    jax.block_until_ready(y)
    y_ref = x @ weights + bias
    assert jnp.allclose(y, y_ref, atol=1e-5, rtol=1e-5)

    # 2) Ragged shapes exercising padding, multi-tile columns, the multi-step
    #    K reduction, and the small-batch tn-halving branch (still small).
    k_x2, k_p2 = jax.random.split(jax.random.PRNGKey(1))
    n2, k2_, m2 = 40, 1200, 300
    x2 = jax.random.normal(k_x2, (n2, k2_), jnp.float32)
    w2, b2 = init_linear_params(k_p2, k2_, m2)

    y2 = linear_forward(x2, w2, b2)
    jax.block_until_ready(y2)
    y2_ref = x2 @ w2 + b2
    assert jnp.allclose(y2, y2_ref, atol=1e-4, rtol=1e-4)

    # 3) bf16 inputs (native MXU path) exercising the f32-scratch kernel with
    #    bf16 output; looser tolerance for the bf16 output cast.
    x3 = x2.astype(jnp.bfloat16)
    w3 = w2.astype(jnp.bfloat16)
    b3 = b2.astype(jnp.bfloat16)
    y3 = linear_forward(x3, w3, b3)
    jax.block_until_ready(y3)
    y3_ref = (x3.astype(jnp.float32) @ w3.astype(jnp.float32)
              + b3.astype(jnp.float32))
    assert jnp.allclose(y3.astype(jnp.float32), y3_ref, atol=2e-2, rtol=2e-2)

    # TODO(synk): backward / update_weights of the original module are training
    # utilities and are intentionally not ported (forward pass only).
    print("KERNEL_OK")
</pallas_src>

<mosaic_0001>
module attributes {stable_mosaic.version = 11 : i64} {
  func.func @_linear_kernel_accum_in_out(%arg0: i32, %arg1: i32, %arg2: i32, %arg3: memref<8x256xf32, #tpu.memory_space<vmem>>, %arg4: memref<256x256xf32, #tpu.memory_space<vmem>>, %arg5: memref<1x256xf32, #tpu.memory_space<vmem>>, %arg6: memref<8x256xf32, #tpu.memory_space<vmem>>) attributes {dimension_semantics = [#tpu.dimension_semantics<parallel>, #tpu.dimension_semantics<parallel>, #tpu.dimension_semantics<arbitrary>], iteration_bounds = array<i64: 1, 1, 1>, scalar_prefetch = 0 : i64, scratch_operands = 0 : i64, tpu.core_type = #tpu.core_type<tc>, window_params = [{transform_indices = @transform_0, window_bounds = array<i64: 8, 256>}, {transform_indices = @transform_1, window_bounds = array<i64: 256, 256>}, {transform_indices = @transform_2, window_bounds = array<i64: 1, 256>}, {transform_indices = @transform_3, window_bounds = array<i64: 8, 256>}]} {
    %c0_i32 = arith.constant 0 : i32
    %0 = arith.cmpi eq, %arg2, %c0_i32 : i32
    %1 = arith.extui %0 : i1 to i32
    %c0_i32_0 = arith.constant 0 : i32
    %2 = arith.cmpi ne, %1, %c0_i32_0 : i32
    scf.if %2 {
      %c0_8 = arith.constant 0 : index
      %c0_9 = arith.constant 0 : index
      %9 = vector.load %arg5[%c0_8, %c0_9] : memref<1x256xf32, #tpu.memory_space<vmem>>, vector<1x256xf32>
      %10 = vector.shape_cast %9 : vector<1x256xf32> to vector<1x256xf32>
      %11 = vector.broadcast %10 : vector<1x256xf32> to vector<8x256xf32>
      %c0_10 = arith.constant 0 : index
      %c0_11 = arith.constant 0 : index
      %12 = vector.load %arg6[%c0_10, %c0_11] : memref<8x256xf32, #tpu.memory_space<vmem>>, vector<8x256xf32>
      tpu.vector_store %arg6[%c0_10, %c0_11], %11 {strides = array<i32>} : memref<8x256xf32, #tpu.memory_space<vmem>>, vector<8x256xf32>,
    } else {
    }
    %c0 = arith.constant 0 : index
    %c0_1 = arith.constant 0 : index
    %3 = vector.load %arg6[%c0, %c0_1] : memref<8x256xf32, #tpu.memory_space<vmem>>, vector<8x256xf32>
    %c0_2 = arith.constant 0 : index
    %c0_3 = arith.constant 0 : index
    %4 = vector.load %arg3[%c0_2, %c0_3] : memref<8x256xf32, #tpu.memory_space<vmem>>, vector<8x256xf32>
    %c0_4 = arith.constant 0 : index
    %c0_5 = arith.constant 0 : index
    %5 = vector.load %arg4[%c0_4, %c0_5] : memref<256x256xf32, #tpu.memory_space<vmem>>, vector<256x256xf32>
    %cst = arith.constant dense<0.000000e+00> : vector<8x256xf32>
    %6 = tpu.matmul %4, %5, %cst {dimension_numbers = #tpu.dot_dimension_numbers<[1], [0], [0], [1], [0, 0, 1, 1], [], []>} : vector<8x256xf32>, vector<256x256xf32>, vector<8x256xf32> -> vector<8x256xf32>
    %7 = arith.addf %3, %6 : vector<8x256xf32>
    %c0_6 = arith.constant 0 : index
    %c0_7 = arith.constant 0 : index
    %8 = vector.load %arg6[%c0_6, %c0_7] : memref<8x256xf32, #tpu.memory_space<vmem>>, vector<8x256xf32>
    tpu.vector_store %arg6[%c0_6, %c0_7], %7 {strides = array<i32>} : memref<8x256xf32, #tpu.memory_space<vmem>>, vector<8x256xf32>,
    return
  }
  func.func @transform_0(%arg0: i32, %arg1: i32, %arg2: i32) -> (i32, i32) {
    %c0_i32 = arith.constant 0 : i32
    return %arg0, %arg2 : i32, i32
  }
  func.func @transform_1(%arg0: i32, %arg1: i32, %arg2: i32) -> (i32, i32) {
    %c0_i32 = arith.constant 0 : i32
    return %arg2, %arg1 : i32, i32
  }
  func.func @transform_2(%arg0: i32, %arg1: i32, %arg2: i32) -> (i32, i32) {
    %c0_i32 = arith.constant 0 : i32
    %c0_i32_0 = arith.constant 0 : i32
    return %c0_i32, %arg1 : i32, i32
  }
  func.func @transform_3(%arg0: i32, %arg1: i32, %arg2: i32) -> (i32, i32) {
    %c0_i32 = arith.constant 0 : i32
    return %arg0, %arg1 : i32, i32
  }
}

</mosaic_0001>

<llo_original>
// kernel: tpu_custom_call.1
$region0: #{tpu_custom_call.1}
  #allocation0 [shape = 'u32[]', space=smem, size = 0x4, offset = 0x4, fixed_abs, tag = 'smem constant byte address 0x4 - core index']
  #allocation1 [shape = 'u32[144,128]{1,0:T(1,128)}', space=vmem, size = 0x12000, scoped, tag = 'internal scratch']
  %s0 = inlined_call_operand.hbm [shape: f32[8,256], index: 0, kind: input, shape index: {}]
  %s1 = inlined_call_operand.hbm [shape: f32[256,256], index: 1, kind: input, shape index: {}]
  %s2 = inlined_call_operand.vmem [shape: f32[1,256], index: 2, kind: input, shape index: {}]
  %s3 = inlined_call_operand.hbm [shape: f32[8,256], index: 3, kind: output, shape index: {}]
  %s4 = sld [smem:[#allocation0]]
  $region34: #{tpu_custom_call.1} parent=0
    _
  %s6 = ssub.s32 1, %s4
  %s7 = scalar_select 0, %s6, %s4
  $region1: #{tpu_custom_call.1} parent=0
    #allocation2 [shape = 'u8[8192]{0}', space=vmem, size = 0x2000, scoped, tag = 'input window, operand 0, single buffered']
    #allocation3 [shape = 's32[1]{0}', space=sflag, size = 0x4, scoped, tag = 'scoped memory for tpu_custom_call.1']
    #allocation4 [shape = 's32[1]{0}', space=sflag, size = 0x4, scoped, tag = 'scoped memory for tpu_custom_call.1']
    #allocation5 [shape = 'u8[262144]{0}', space=vmem, size = 0x40000, scoped, tag = 'input window, operand 1, single buffered']
    #allocation6 [shape = 's32[1]{0}', space=sflag, size = 0x4, scoped, tag = 'scoped memory for tpu_custom_call.1']
    #allocation7 [shape = 'u8[8192]{0}', space=vmem, size = 0x2000, scoped, tag = 'output window, operand 0, single buffered']
    %8 = vsyncpa [#allocation3], 0
    %9 = vsyncpa [#allocation6], 0
    %10 = vsyncpa [#allocation4], 0
    // Predicated region
    $region2: #{tpu_custom_call.1} parent=1 // pred_check
      _
    $region3: #{tpu_custom_call.1} parent=1 // pred_check_branch
      %12 = sbr.rel (0) target = $region5
    $region4: #{tpu_custom_call.1} parent=1 // pred_region
      %s14 = ssub.s32 256, 256
      %15 = vsyncadd [#allocation3], %s14
      %s17 = sshll.u32 [#allocation2], 4
      %s18 = int_to_ptr.vmem [resolvable:$true] %s17
      %20 = dma.hbm_to_vmem [thread:$0]  %s0, 256, %s18, [#allocation3]
    $region5: #{tpu_custom_call.1} parent=1 // pred_fallthru
      _
    // Predicated region
    $region6: #{tpu_custom_call.1} parent=1 // pred_check
      _
    $region7: #{tpu_custom_call.1} parent=1 // pred_check_branch
      %22 = sbr.rel (0) target = $region9
    $region8: #{tpu_custom_call.1} parent=1 // pred_region
      %s24 = ssub.s32 8192, 8192
      %25 = vsyncadd [#allocation6], %s24
      %s26 = sshll.u32 [#allocation5], 4
      %s27 = int_to_ptr.vmem [resolvable:$true] %s26
      %32 = dma.hbm_to_vmem [thread:$0]  %s1, 8192, %s27, [#allocation6], 256, 256, 16
    $region9: #{tpu_custom_call.1} parent=1 // pred_fallthru
      _
    // Predicated region
    $region10: #{tpu_custom_call.1} parent=1 // pred_check
      _
    $region11: #{tpu_custom_call.1} parent=1 // pred_check_branch
      %34 = sbr.rel (0) target = $region13
    $region12: #{tpu_custom_call.1} parent=1 // pred_region
      _
    $region13: #{tpu_custom_call.1} parent=1 // pred_fallthru
      _
    // Predicated region
    $region14: #{tpu_custom_call.1} parent=1 // pred_check
      _
    $region15: #{tpu_custom_call.1} parent=1 // pred_check_branch
      %36 = sbr.rel (0) target = $region17
    $region16: #{tpu_custom_call.1} parent=1 // pred_region
      %37 = dma.done [#allocation3], 256
    $region17: #{tpu_custom_call.1} parent=1 // pred_fallthru
      _
    // Predicated region
    $region18: #{tpu_custom_call.1} parent=1 // pred_check
      _
    $region19: #{tpu_custom_call.1} parent=1 // pred_check_branch
      %39 = sbr.rel (0) target = $region21
    $region20: #{tpu_custom_call.1} parent=1 // pred_region
      %40 = dma.done [#allocation6], 8192
    $region21: #{tpu_custom_call.1} parent=1 // pred_fallthru
      _
    %p41 = scmp.eq.s32.totalorder 0, 0
    // Predicated region
    $region22: #{tpu_custom_call.1} parent=1 // pred_check
      %p42 = pneg %p41
    $region23: #{tpu_custom_call.1} parent=1 // pred_check_branch
      %44 = sbr.rel (%p42) target = $region25
    $region24: #{tpu_custom_call.1} parent=1 // pred_region
      %v45 = vld [vmem:[%s2] sm:$0x3]
      %v47 = vlaneseq
      %v48 = vshrl.u32 %v47, 7
      %v49 = vsub.s32 0, %v48
      %v50 = vrot.slane %v45, %v49
      %v51 = vlaneseq
      %v52 = vshrl.u32 %v51, 7
      %v53 = vsub.s32 1, %v52
      %v54 = vrot.slane %v45, %v53
      %57 = vst [vmem:[#allocation7] sm:$0xff] %v50
      %58 = vst [vmem:[#allocation7 + $0x8] sm:$0xff] %v54
    $region25: #{tpu_custom_call.1} parent=1 // pred_fallthru
      _
    %v59 = vld [vmem:[#allocation7] sm:$0xff]
    %v60 = vld [vmem:[#allocation7 + $0x8] sm:$0xff]
    %v61 = vld [vmem:[#allocation2] sm:$0xff]
    %v62 = vld [vmem:[#allocation2 + $0x8] sm:$0xff]
    %v63 = vld [vmem:[#allocation5] sm:$0xff]
    %v64 = vld [vmem:[#allocation5 + $0x8] sm:$0xff]
    %v65 = vld [vmem:[#allocation5 + $0x10] sm:$0xff]
    %v66 = vld [vmem:[#allocation5 + $0x18] sm:$0xff]
    %v67 = vld [vmem:[#allocation5 + $0x20] sm:$0xff]
    %v68 = vld [vmem:[#allocation5 + $0x28] sm:$0xff]
    %v69 = vld [vmem:[#allocation5 + $0x30] sm:$0xff]
    %v70 = vld [vmem:[#allocation5 + $0x38] sm:$0xff]
    %v71 = vld [vmem:[#allocation5 + $0x40] sm:$0xff]
    %v72 = vld [vmem:[#allocation5 + $0x48] sm:$0xff]
    %v73 = vld [vmem:[#allocation5 + $0x50] sm:$0xff]
    %v74 = vld [vmem:[#allocation5 + $0x58] sm:$0xff]
    %v75 = vld [vmem:[#allocation5 + $0x60] sm:$0xff]
    %v76 = vld [vmem:[#allocation5 + $0x68] sm:$0xff]
    %v77 = vld [vmem:[#allocation5 + $0x70] sm:$0xff]
    %v78 = vld [vmem:[#allocation5 + $0x78] sm:$0xff]
    %v79 = vld [vmem:[#allocation5 + $0x80] sm:$0xff]
    %v80 = vld [vmem:[#allocation5 + $0x88] sm:$0xff]
    %v81 = vld [vmem:[#allocation5 + $0x90] sm:$0xff]
    %v82 = vld [vmem:[#allocation5 + $0x98] sm:$0xff]
    %v83 = vld [vmem:[#allocation5 + $0xa0] sm:$0xff]
    %v84 = vld [vmem:[#allocation5 + $0xa8] sm:$0xff]
    %v85 = vld [vmem:[#allocation5 + $0xb0] sm:$0xff]
    %v86 = vld [vmem:[#allocation5 + $0xb8] sm:$0xff]
    %v87 = vld [vmem:[#allocation5 + $0xc0] sm:$0xff]
    %v88 = vld [vmem:[#allocation5 + $0xc8] sm:$0xff]
    %v89 = vld [vmem:[#allocation5 + $0xd0] sm:$0xff]
    %v90 = vld [vmem:[#allocation5 + $0xd8] sm:$0xff]
    %v91 = vld [vmem:[#allocation5 + $0xe0] sm:$0xff]
    %v92 = vld [vmem:[#allocation5 + $0xe8] sm:$0xff]
    %v93 = vld [vmem:[#allocation5 + $0xf0] sm:$0xff]
    %v94 = vld [vmem:[#allocation5 + $0xf8] sm:$0xff]
    %v95 = vld [vmem:[#allocation5 + $0x100] sm:$0xff]
    %v96 = vld [vmem:[#allocation5 + $0x108] sm:$0xff]
    %v97 = vld [vmem:[#allocation5 + $0x110] sm:$0xff]
    %v98 = vld [vmem:[#allocation5 + $0x118] sm:$0xff]
    %v99 = vld [vmem:[#allocation5 + $0x120] sm:$0xff]
    %v100 = vld [vmem:[#allocation5 + $0x128] sm:$0xff]
    %v101 = vld [vmem:[#allocation5 + $0x130] sm:$0xff]
    %v102 = vld [vmem:[#allocation5 + $0x138] sm:$0xff]
    %v103 = vld [vmem:[#allocation5 + $0x140] sm:$0xff]
    %v104 = vld [vmem:[#allocation5 + $0x148] sm:$0xff]
    %v105 = vld [vmem:[#allocation5 + $0x150] sm:$0xff]
    %v106 = vld [vmem:[#allocation5 + $0x158] sm:$0xff]
    %v107 = vld [vmem:[#allocation5 + $0x160] sm:$0xff]
    %v108 = vld [vmem:[#allocation5 + $0x168] sm:$0xff]
    %v109 = vld [vmem:[#allocation5 + $0x170] sm:$0xff]
    %v110 = vld [vmem:[#allocation5 + $0x178] sm:$0xff]
    %v111 = vld [vmem:[#allocation5 + $0x180] sm:$0xff]
    %v112 = vld [vmem:[#allocation5 + $0x188] sm:$0xff]
    %v113 = vld [vmem:[#allocation5 + $0x190] sm:$0xff]
    %v114 = vld [vmem:[#allocation5 + $0x198] sm:$0xff]
    %v115 = vld [vmem:[#allocation5 + $0x1a0] sm:$0xff]
    %v116 = vld [vmem:[#allocation5 + $0x1a8] sm:$0xff]
    %v117 = vld [vmem:[#allocation5 + $0x1b0] sm:$0xff]
    %v118 = vld [vmem:[#allocation5 + $0x1b8] sm:$0xff]
    %v119 = vld [vmem:[#allocation5 + $0x1c0] sm:$0xff]
    %v120 = vld [vmem:[#allocation5 + $0x1c8] sm:$0xff]
    %v121 = vld [vmem:[#allocation5 + $0x1d0] sm:$0xff]
    %v122 = vld [vmem:[#allocation5 + $0x1d8] sm:$0xff]
    %v123 = vld [vmem:[#allocation5 + $0x1e0] sm:$0xff]
    %v124 = vld [vmem:[#allocation5 + $0x1e8] sm:$0xff]
    %v125 = vld [vmem:[#allocation5 + $0x1f0] sm:$0xff]
    %v126 = vld [vmem:[#allocation5 + $0x1f8] sm:$0xff]
    %127 = vmatprep.subr.mxu0 %v64
    %128 = vmatpush1.msra.mxu0 %v63
    %129 = vmatprep.subr.mxu0 %v66
    %130 = vmatpush1.msra.mxu0 %v65
    %131 = vmatprep.subr.mxu0 %v68
    %132 = vmatpush1.msra.mxu0 %v67
    %133 = vmatprep.subr.mxu0 %v70
    %134 = vmatpush1.msra.mxu0 %v69
    %135 = vmatprep.subr.mxu0 %v72
    %136 = vmatpush1.msra.mxu0 %v71
    %137 = vmatprep.subr.mxu0 %v74
    %138 = vmatpush1.msra.mxu0 %v73
    %139 = vmatprep.subr.mxu0 %v76
    %140 = vmatpush1.msra.mxu0 %v75
    %141 = vmatprep.subr.mxu0 %v78
    %142 = vmatpush1.msra.mxu0 %v77
    %143 = vmatprep.subr.mxu0 %v80
    %144 = vmatpush1.msra.mxu0 %v79
    %145 = vmatprep.subr.mxu0 %v82
    %146 = vmatpush1.msra.mxu0 %v81
    %147 = vmatprep.subr.mxu0 %v84
    %148 = vmatpush1.msra.mxu0 %v83
    %149 = vmatprep.subr.mxu0 %v86
    %150 = vmatpush1.msra.mxu0 %v85
    %151 = vmatprep.subr.mxu0 %v88
    %152 = vmatpush1.msra.mxu0 %v87
    %153 = vmatprep.subr.mxu0 %v90
    %154 = vmatpush1.msra.mxu0 %v89
    %155 = vmatprep.subr.mxu0 %v92
    %156 = vmatpush1.msra.mxu0 %v91
    %157 = vmatprep.subr.mxu0 %v94
    %158 = vmatpush1.msra.mxu0 %v93
    %159 = vmatprep.subr.mxu0 %v96
    %160 = vmatpush1.msra.mxu0 %v95
    %161 = vmatprep.subr.mxu0 %v98
    %162 = vmatpush1.msra.mxu0 %v97
    %163 = vmatprep.subr.mxu0 %v100
    %164 = vmatpush1.msra.mxu0 %v99
    %165 = vmatprep.subr.mxu0 %v102
    %166 = vmatpush1.msra.mxu0 %v101
    %167 = vmatprep.subr.mxu0 %v104
    %168 = vmatpush1.msra.mxu0 %v103
    %169 = vmatprep.subr.mxu0 %v106
    %170 = vmatpush1.msra.mxu0 %v105
    %171 = vmatprep.subr.mxu0 %v108
    %172 = vmatpush1.msra.mxu0 %v107
    %173 = vmatprep.subr.mxu0 %v110
    %174 = vmatpush1.msra.mxu0 %v109
    %175 = vmatprep.subr.mxu0 %v112
    %176 = vmatpush1.msra.mxu0 %v111
    %177 = vmatprep.subr.mxu0 %v114
    %178 = vmatpush1.msra.mxu0 %v113
    %179 = vmatprep.subr.mxu0 %v116
    %180 = vmatpush1.msra.mxu0 %v115
    %181 = vmatprep.subr.mxu0 %v118
    %182 = vmatpush1.msra.mxu0 %v117
    %183 = vmatprep.subr.mxu0 %v120
    %184 = vmatpush1.msra.mxu0 %v119
    %185 = vmatprep.subr.mxu0 %v122
    %186 = vmatpush1.msra.mxu0 %v121
    %187 = vmatprep.subr.mxu0 %v124
    %188 = vmatpush1.msra.mxu0 %v123
    %189 = vmatprep.subr.mxu0 %v126
    %190 = vmatpush1.msra.mxu0 %v125
    %191 = vmatprep.mubr.f32.mxu0 %v62
    %192 = vmatmul.mubr.f32.gmra.mrb[0].mxu0 %v61
    %v193 = vpop.f32.mrb[0].mxu0
    %v194 = vadd.f32 0.0, %v193
    %v195 = vpop.f32.mrb[0].mxu0
    %v196 = vadd.f32 0.0, %v195
    %197 = vdwg.mxu0
    %v198 = vadd.f32 %v59, %v194
    %v199 = vadd.f32 %v60, %v196
    %200 = vst [vmem:[#allocation7] sm:$0xff] %v198
    %201 = vst [vmem:[#allocation7 + $0x8] sm:$0xff] %v199
    // Predicated region
    $region26: #{tpu_custom_call.1} parent=1 // pred_check
      _
    $region27: #{tpu_custom_call.1} parent=1 // pred_check_branch
      %203 = sbr.rel (0) target = $region29
    $region28: #{tpu_custom_call.1} parent=1 // pred_region
      %s205 = ssub.s32 256, 256
      %206 = vsyncadd [#allocation4], %s205
      %s208 = sshll.u32 [#allocation7], 4
      %s209 = int_to_ptr.vmem [resolvable:$true] %s208
      %211 = dma.vmem_to_hbm [thread:$0]  %s209, 256, %s3, [#allocation4]
    $region29: #{tpu_custom_call.1} parent=1 // pred_fallthru
      _
    // Predicated region
    $region30: #{tpu_custom_call.1} parent=1 // pred_check
      _
    $region31: #{tpu_custom_call.1} parent=1 // pred_check_branch
      %213 = sbr.rel (0) target = $region33
    $region32: #{tpu_custom_call.1} parent=1 // pred_region
      %214 = dma.done [#allocation4], 256
    $region33: #{tpu_custom_call.1} parent=1 // pred_fallthru
      _
    %215 = vsyncpa [#allocation3], 1
    %216 = vsyncpa [#allocation6], 1
    %217 = vsyncpa [#allocation4], 1

</llo_original>
